<compile_context>
chip_gen: v7x
topology: tpu7x:2x2x1
jax: 0.10.0
libtpu: 0.0.40
codegen_flags: <defaults>
</compile_context>

<pallas_src>
import functools

import jax
import jax.numpy as jnp
from jax import lax
from jax.experimental import pallas as pl
from jax.experimental.pallas import tpu as pltpu


def _round_up(x: int, m: int) -> int:
    return ((x + m - 1) // m) * m


def _classifier_loss_kernel(a_ref, pn_ref, pnsq_ref, asq_ref, out_ref,
                            m_ap_ref, m_an_ref, *, margin: float, tile_mk: int,
                            precision):
    # Grid queries are hoisted to the top level of the kernel body: binding
    # pl.program_id inside a pl.when body breaks interpret-mode lowering.
    j = pl.program_id(1)
    n_j = pl.num_programs(1)

    @pl.when(j == 0)
    def _init():
        m_ap_ref[...] = jnp.full_like(m_ap_ref, -jnp.inf)
        m_an_ref[...] = jnp.full_like(m_an_ref, jnp.inf)

    # One fused MXU matmul per step: (-2 * anchor) tile against the packed,
    # pre-transposed [P | N] column tile.  Native-dtype operands, f32 acc.
    dot = jnp.dot(a_ref[...], pn_ref[...],
                  precision=precision, preferred_element_type=jnp.float32)

    # Squared distance minus the per-row ||a||^2 constant:
    #   val = ||col||^2 - 2 * a . col   (anchor pre-scaled -> just an add).
    # Padded columns hold -inf (max path) / +inf (min path) in pnsq, so the
    # reductions need no in-kernel column masking.
    val = pnsq_ref[...] + dot                       # (tile_n, 2*tile_mk) f32
    val_ap = val[:, :tile_mk]                       # positives -> running max
    val_an = val[:, tile_mk:]                       # negatives -> running min
    m_ap_ref[...] = jnp.maximum(m_ap_ref[...],
                                jnp.max(val_ap, axis=1, keepdims=True))
    m_an_ref[...] = jnp.minimum(m_an_ref[...],
                                jnp.min(val_an, axis=1, keepdims=True))

    # Finalize: add ||a||^2, clamp, sqrt only the reduced vectors, relu(margin).
    @pl.when(j == n_j - 1)
    def _finalize():
        a_sq = asq_ref[...]                                      # (tile_n, 1)
        hp = jnp.sqrt(jnp.maximum(a_sq + m_ap_ref[...], 0.0))    # hardest positive
        hn = jnp.sqrt(jnp.maximum(a_sq + m_an_ref[...], 0.0))    # hardest negative
        out_ref[...] = jnp.maximum(hp - hn + jnp.float32(margin), 0.0)


def _vmem_capacity_bytes() -> int:
    """Physical per-core VMEM; conservative (v7x-sized) fallback."""
    try:
        return int(pltpu.get_tpu_info().vmem_capacity_bytes)
    except Exception:  # interpret mode / CPU / attribute mismatch
        return 64 * 1024 * 1024


def _estimate_vmem_bytes(tile_n: int, tile_mk: int, d_pad: int,
                         op_itemsize: int) -> int:
    two_t = 2 * tile_mk
    b = 0
    b += 2 * tile_n * d_pad * op_itemsize       # anchor tile (double buffered)
    b += 2 * d_pad * two_t * op_itemsize        # fused [P|N] tile (double buffered)
    b += 2 * two_t * 4                          # pnsq (double buffered)
    b += 4 * tile_n * 4                         # asq + out (double buffered)
    b += 2 * tile_n * 4                         # running max/min scratch
    b += 3 * tile_n * two_t * 4                 # f32 matmul result + elementwise temps
    return b


def classifier_loss(anchor, positive, negative, margin: float = 1.0, *,
                    compute_dtype=jnp.bfloat16,
                    block_rows: int | None = None,
                    block_cols: int | None = None):
    """Pallas TPU implementation of ClassifierLoss.forward. Returns a scalar f32."""
    assert anchor.ndim == 2 and positive.ndim == 2 and negative.ndim == 2
    n_rows, d = anchor.shape
    m_rows = positive.shape[0]
    k_rows = negative.shape[0]
    assert positive.shape[1] == d and negative.shape[1] == d
    assert n_rows >= 1 and m_rows >= 1 and k_rows >= 1

    f32 = jnp.float32
    d_pad = _round_up(d, 128)
    op_itemsize = jnp.dtype(compute_dtype).itemsize
    max_mk = max(m_rows, k_rows)

    # ---- tile selection & VMEM budget ---------------------------------------
    vmem_cap = _vmem_capacity_bytes()
    tile_budget = int(vmem_cap * 0.55)                 # working-set target
    vmem_limit = min(int(vmem_cap * 0.80), 112 * 1024 * 1024)

    auto_n = block_rows is None
    auto_mk = block_cols is None
    if auto_n:
        tile_n = min(1024, _round_up(n_rows, 8))
        if n_rows > 8:
            # keep >= 2 row tiles so both TensorCores get work (v7x megacore).
            tile_n = min(tile_n, _round_up((n_rows + 1) // 2, 8))
    else:
        tile_n = block_rows
    tile_mk = min(1024, _round_up(max_mk, 128)) if auto_mk else block_cols
    assert tile_n % 8 == 0 and tile_mk % 128 == 0

    # Shrink auto-chosen tiles until the working set fits the budget.  Shrink
    # the column tile first: total HBM traffic depends only on the row tile.
    while _estimate_vmem_bytes(tile_n, tile_mk, d_pad, op_itemsize) > tile_budget:
        if auto_mk and tile_mk > 128:
            tile_mk = max(128, _round_up(tile_mk // 2, 128))
        elif auto_n and tile_n > 8:
            tile_n = max(8, _round_up(tile_n // 2, 8))
        else:
            break

    n_pad = _round_up(n_rows, tile_n)
    l_pad = _round_up(max_mk, tile_mk)
    ncols = l_pad // tile_mk

    # f32 matmuls on TPU default to reduced precision; force full accuracy then.
    precision = (lax.Precision.HIGHEST
                 if jnp.dtype(compute_dtype) == jnp.dtype(jnp.float32)
                 else lax.Precision.DEFAULT)

    # ---- operand preparation (one-time O(N*D + (M+K)*D) wrapper work) -------
    a32 = anchor.astype(f32)
    p32 = positive.astype(f32)
    n32 = negative.astype(f32)

    # ||a||^2 stays f32 and is only added to the reduced (tile_n, 1) vectors.
    a_sq = jnp.pad(jnp.sum(a32 * a32, axis=1, keepdims=True),
                   ((0, n_pad - n_rows), (0, 0)))
    # Anchor pre-scaled by -2 so the kernel's elementwise step is a plain add.
    a_m2 = jnp.pad(-2.0 * a32,
                   ((0, n_pad - n_rows), (0, d_pad - d))).astype(compute_dtype)

    def _prep_columns(x32, rows, pad_value):
        # Pre-transposed (D, L) layout (canonical MXU RHS), chopped into
        # tile_mk-wide column tiles; squared norms with padded columns
        # pre-masked so the kernel's max/min ignore them.
        xt = jnp.pad(x32, ((0, l_pad - rows), (0, d_pad - d)))
        xt = xt.astype(compute_dtype).T                       # (d_pad, l_pad)
        sq = jnp.pad(jnp.sum(x32 * x32, axis=1), (0, l_pad - rows))
        sq = jnp.where(jnp.arange(l_pad) < rows, sq, pad_value)
        return xt.reshape(d_pad, ncols, tile_mk), sq.reshape(1, ncols, tile_mk)

    p_t, p_sq = _prep_columns(p32, m_rows, -jnp.inf)   # max path ignores pads
    n_t, n_sq = _prep_columns(n32, k_rows, jnp.inf)    # min path ignores pads

    # Fused operands: column tile j holds [P_j | N_j] side by side.
    pn = jnp.concatenate([p_t, n_t], axis=2).reshape(d_pad, ncols * 2 * tile_mk)
    pn_sq = jnp.concatenate([p_sq, n_sq], axis=2)
    pn_sq = pn_sq.reshape(1, ncols * 2 * tile_mk).astype(f32)

    grid = (n_pad // tile_n, ncols)
    kernel = functools.partial(_classifier_loss_kernel, margin=float(margin),
                               tile_mk=tile_mk, precision=precision)

    per_row = pl.pallas_call(
        kernel,
        out_shape=jax.ShapeDtypeStruct((n_pad, 1), jnp.float32),
        grid_spec=pltpu.PrefetchScalarGridSpec(
            num_scalar_prefetch=0,
            grid=grid,
            in_specs=[
                pl.BlockSpec((tile_n, d_pad), lambda i, j: (i, 0)),       # -2*anchor
                pl.BlockSpec((d_pad, 2 * tile_mk), lambda i, j: (0, j)),  # [P|N] tile
                pl.BlockSpec((1, 2 * tile_mk), lambda i, j: (0, j)),      # ||col||^2
                pl.BlockSpec((tile_n, 1), lambda i, j: (i, 0)),           # ||a||^2
            ],
            out_specs=pl.BlockSpec((tile_n, 1), lambda i, j: (i, 0)),
            scratch_shapes=[
                pltpu.VMEM((tile_n, 1), jnp.float32),   # running max (pos path)
                pltpu.VMEM((tile_n, 1), jnp.float32),   # running min (neg path)
            ],
        ),
        compiler_params=pltpu.CompilerParams(
            dimension_semantics=("parallel", "arbitrary"),
            vmem_limit_bytes=vmem_limit,
        ),
    )(a_m2, pn, pn_sq, a_sq)

    # Padded rows are simply dropped here (no in-kernel row masking needed).
    return jnp.sum(per_row[:n_rows, 0]) / jnp.float32(n_rows)


def _reference_loss(anchor, positive, negative, margin: float = 1.0):
    """Pure-JAX reference mirroring the PyTorch forward (naive pairwise cdist)."""
    def cdist(x, y):
        diff = x[:, None, :].astype(jnp.float32) - y[None, :, :].astype(jnp.float32)
        return jnp.sqrt(jnp.sum(diff * diff, axis=-1))

    hp = jnp.max(cdist(anchor, positive), axis=1)
    hn = jnp.min(cdist(anchor, negative), axis=1)
    return jnp.mean(jnp.maximum(hp - hn + margin, 0.0))


if __name__ == "__main__":
    root = jax.random.PRNGKey(0)
    k1, k2, k3, k4, k5, k6 = jax.random.split(root, 6)

    # Test 1: small non-aligned shapes (exercises D / M / K padding, 1 col tile).
    N, M, K, D = 16, 24, 40, 48
    anchor = jax.random.normal(k1, (N, D), dtype=jnp.float32)
    positive = jax.random.normal(k2, (M, D), dtype=jnp.float32)
    negative = jax.random.normal(k3, (K, D), dtype=jnp.float32) + 0.5

    ref1 = _reference_loss(anchor, positive, negative, margin=1.0)
    out1_f32 = jax.block_until_ready(
        classifier_loss(anchor, positive, negative, margin=1.0,
                        compute_dtype=jnp.float32))
    assert jnp.allclose(out1_f32, ref1, atol=1e-3, rtol=1e-3), (out1_f32, ref1)
    out1_bf16 = jax.block_until_ready(
        classifier_loss(anchor, positive, negative, margin=1.0))
    assert jnp.allclose(out1_bf16, ref1, atol=3e-2, rtol=3e-2), (out1_bf16, ref1)

    # Test 2: multi-tile grid (row AND column tiles) with remainder columns in
    # both the positive and the negative stream.
    N2, M2, K2, D2 = 20, 300, 600, 160
    anchor2 = jax.random.normal(k4, (N2, D2), dtype=jnp.float32)
    positive2 = jax.random.normal(k5, (M2, D2), dtype=jnp.float32)
    negative2 = jax.random.normal(k6, (K2, D2), dtype=jnp.float32) + 0.25

    ref2 = _reference_loss(anchor2, positive2, negative2, margin=0.5)
    out2_f32 = jax.block_until_ready(
        classifier_loss(anchor2, positive2, negative2, margin=0.5,
                        compute_dtype=jnp.float32, block_rows=8, block_cols=256))
    assert jnp.allclose(out2_f32, ref2, atol=1e-3, rtol=1e-3), (out2_f32, ref2)
    out2_bf16 = jax.block_until_ready(
        classifier_loss(anchor2, positive2, negative2, margin=0.5,
                        block_rows=8, block_cols=256))
    assert jnp.allclose(out2_bf16, ref2, atol=3e-2, rtol=3e-2), (out2_bf16, ref2)

    print("KERNEL_OK")
</pallas_src>

<mosaic_0001>
module attributes {stable_mosaic.version = 11 : i64} {
  func.func @_classifier_loss_kernel(%arg0: i32, %arg1: i32, %arg2: memref<8x128xf32, #tpu.memory_space<vmem>>, %arg3: memref<128x256xf32, #tpu.memory_space<vmem>>, %arg4: memref<1x256xf32, #tpu.memory_space<vmem>>, %arg5: memref<8x1xf32, #tpu.memory_space<vmem>>, %arg6: memref<8x1xf32, #tpu.memory_space<vmem>>, %arg7: memref<8x1xf32, #tpu.memory_space<vmem>>, %arg8: memref<8x1xf32, #tpu.memory_space<vmem>>) attributes {dimension_semantics = [#tpu.dimension_semantics<parallel>, #tpu.dimension_semantics<arbitrary>], iteration_bounds = array<i64: 2, 1>, scalar_prefetch = 0 : i64, scratch_operands = 2 : i64, tpu.core_type = #tpu.core_type<tc>, window_params = [{transform_indices = @transform_0, window_bounds = array<i64: 8, 128>}, {transform_indices = @transform_1, window_bounds = array<i64: 128, 256>}, {transform_indices = @transform_2, window_bounds = array<i64: 1, 256>}, {transform_indices = @transform_3, window_bounds = array<i64: 8, 1>}, {transform_indices = @transform_4, window_bounds = array<i64: 8, 1>}]} {
    %c0_i32 = arith.constant 0 : i32
    %0 = arith.cmpi eq, %arg1, %c0_i32 : i32
    %1 = arith.extui %0 : i1 to i32
    %c0_i32_0 = arith.constant 0 : i32
    %2 = arith.cmpi ne, %1, %c0_i32_0 : i32
    scf.if %2 {
      %cst_18 = arith.constant 0xFF800000 : f32
      %24 = vector.broadcast %cst_18 : f32 to vector<8x1xf32>
      %c0_19 = arith.constant 0 : index
      %c0_20 = arith.constant 0 : index
      %25 = vector.load %arg7[%c0_19, %c0_20] : memref<8x1xf32, #tpu.memory_space<vmem>>, vector<8x1xf32>
      tpu.vector_store %arg7[%c0_19, %c0_20], %24 {strides = array<i32>} : memref<8x1xf32, #tpu.memory_space<vmem>>, vector<8x1xf32>,
      %cst_21 = arith.constant 0x7F800000 : f32
      %26 = vector.broadcast %cst_21 : f32 to vector<8x1xf32>
      %c0_22 = arith.constant 0 : index
      %c0_23 = arith.constant 0 : index
      %27 = vector.load %arg8[%c0_22, %c0_23] : memref<8x1xf32, #tpu.memory_space<vmem>>, vector<8x1xf32>
      tpu.vector_store %arg8[%c0_22, %c0_23], %26 {strides = array<i32>} : memref<8x1xf32, #tpu.memory_space<vmem>>, vector<8x1xf32>,
    } else {
    }
    %c0 = arith.constant 0 : index
    %c0_1 = arith.constant 0 : index
    %3 = vector.load %arg2[%c0, %c0_1] : memref<8x128xf32, #tpu.memory_space<vmem>>, vector<8x128xf32>
    %c0_2 = arith.constant 0 : index
    %c0_3 = arith.constant 0 : index
    %4 = vector.load %arg3[%c0_2, %c0_3] : memref<128x256xf32, #tpu.memory_space<vmem>>, vector<128x256xf32>
    %cst = arith.constant dense<0.000000e+00> : vector<8x256xf32>
    %5 = tpu.matmul %3, %4, %cst {dimension_numbers = #tpu.dot_dimension_numbers<[1], [0], [0], [1], [0, 0, 1, 1], [], []>, precision = #tpu.contract_precision<fp32>} : vector<8x128xf32>, vector<128x256xf32>, vector<8x256xf32> -> vector<8x256xf32>
    %c0_4 = arith.constant 0 : index
    %c0_5 = arith.constant 0 : index
    %6 = vector.load %arg4[%c0_4, %c0_5] : memref<1x256xf32, #tpu.memory_space<vmem>>, vector<1x256xf32>
    %7 = vector.broadcast %6 : vector<1x256xf32> to vector<8x256xf32>
    %8 = arith.addf %7, %5 : vector<8x256xf32>
    %9 = vector.extract_strided_slice %8 {offsets = [0, 0], sizes = [8, 128], strides = [1, 1]} : vector<8x256xf32> to vector<8x128xf32>
    %10 = vector.extract_strided_slice %8 {offsets = [0, 128], sizes = [8, 128], strides = [1, 1]} : vector<8x256xf32> to vector<8x128xf32>
    %c0_6 = arith.constant 0 : index
    %c0_7 = arith.constant 0 : index
    %11 = vector.load %arg7[%c0_6, %c0_7] : memref<8x1xf32, #tpu.memory_space<vmem>>, vector<8x1xf32>
    %cst_8 = arith.constant dense<0xFF800000> : vector<8xf32>
    %12 = vector.multi_reduction <maximumf>, %9, %cst_8 [1] : vector<8x128xf32> to vector<8xf32>
    %13 = vector.shape_cast %12 : vector<8xf32> to vector<8x1xf32>
    %14 = arith.maximumf %11, %13 : vector<8x1xf32>
    %c0_9 = arith.constant 0 : index
    %c0_10 = arith.constant 0 : index
    %15 = vector.load %arg7[%c0_9, %c0_10] : memref<8x1xf32, #tpu.memory_space<vmem>>, vector<8x1xf32>
    tpu.vector_store %arg7[%c0_9, %c0_10], %14 {strides = array<i32>} : memref<8x1xf32, #tpu.memory_space<vmem>>, vector<8x1xf32>,
    %c0_11 = arith.constant 0 : index
    %c0_12 = arith.constant 0 : index
    %16 = vector.load %arg8[%c0_11, %c0_12] : memref<8x1xf32, #tpu.memory_space<vmem>>, vector<8x1xf32>
    %cst_13 = arith.constant dense<0x7F800000> : vector<8xf32>
    %17 = vector.multi_reduction <minimumf>, %10, %cst_13 [1] : vector<8x128xf32> to vector<8xf32>
    %18 = vector.shape_cast %17 : vector<8xf32> to vector<8x1xf32>
    %19 = arith.minimumf %16, %18 : vector<8x1xf32>
    %c0_14 = arith.constant 0 : index
    %c0_15 = arith.constant 0 : index
    %20 = vector.load %arg8[%c0_14, %c0_15] : memref<8x1xf32, #tpu.memory_space<vmem>>, vector<8x1xf32>
    tpu.vector_store %arg8[%c0_14, %c0_15], %19 {strides = array<i32>} : memref<8x1xf32, #tpu.memory_space<vmem>>, vector<8x1xf32>,
    %c0_i32_16 = arith.constant 0 : i32
    %21 = arith.cmpi eq, %arg1, %c0_i32_16 : i32
    %22 = arith.extui %21 : i1 to i32
    %c0_i32_17 = arith.constant 0 : i32
    %23 = arith.cmpi ne, %22, %c0_i32_17 : i32
    scf.if %23 {
      %c0_18 = arith.constant 0 : index
      %c0_19 = arith.constant 0 : index
      %24 = vector.load %arg5[%c0_18, %c0_19] : memref<8x1xf32, #tpu.memory_space<vmem>>, vector<8x1xf32>
      %c0_20 = arith.constant 0 : index
      %c0_21 = arith.constant 0 : index
      %25 = vector.load %arg7[%c0_20, %c0_21] : memref<8x1xf32, #tpu.memory_space<vmem>>, vector<8x1xf32>
      %26 = arith.addf %24, %25 : vector<8x1xf32>
      %cst_22 = arith.constant 0.000000e+00 : f32
      %27 = vector.broadcast %cst_22 : f32 to vector<8x1xf32>
      %28 = arith.maximumf %26, %27 : vector<8x1xf32>
      %29 = math.sqrt %28 : vector<8x1xf32>
      %c0_23 = arith.constant 0 : index
      %c0_24 = arith.constant 0 : index
      %30 = vector.load %arg8[%c0_23, %c0_24] : memref<8x1xf32, #tpu.memory_space<vmem>>, vector<8x1xf32>
      %31 = arith.addf %24, %30 : vector<8x1xf32>
      %cst_25 = arith.constant 0.000000e+00 : f32
      %32 = vector.broadcast %cst_25 : f32 to vector<8x1xf32>
      %33 = arith.maximumf %31, %32 : vector<8x1xf32>
      %34 = math.sqrt %33 : vector<8x1xf32>
      %35 = arith.subf %29, %34 : vector<8x1xf32>
      %cst_26 = arith.constant 1.000000e+00 : f32
      %36 = vector.broadcast %cst_26 : f32 to vector<8x1xf32>
      %37 = arith.addf %35, %36 : vector<8x1xf32>
      %cst_27 = arith.constant 0.000000e+00 : f32
      %38 = vector.broadcast %cst_27 : f32 to vector<8x1xf32>
      %39 = arith.maximumf %37, %38 : vector<8x1xf32>
      %c0_28 = arith.constant 0 : index
      %c0_29 = arith.constant 0 : index
      %40 = vector.load %arg6[%c0_28, %c0_29] : memref<8x1xf32, #tpu.memory_space<vmem>>, vector<8x1xf32>
      tpu.vector_store %arg6[%c0_28, %c0_29], %39 {strides = array<i32>} : memref<8x1xf32, #tpu.memory_space<vmem>>, vector<8x1xf32>,
    } else {
    }
    return
  }
  func.func @transform_0(%arg0: i32, %arg1: i32) -> (i32, i32) {
    %c0_i32 = arith.constant 0 : i32
    %c0_i32_0 = arith.constant 0 : i32
    return %arg0, %c0_i32 : i32, i32
  }
  func.func @transform_1(%arg0: i32, %arg1: i32) -> (i32, i32) {
    %c0_i32 = arith.constant 0 : i32
    %c0_i32_0 = arith.constant 0 : i32
    return %c0_i32, %arg1 : i32, i32
  }
  func.func @transform_2(%arg0: i32, %arg1: i32) -> (i32, i32) {
    %c0_i32 = arith.constant 0 : i32
    %c0_i32_0 = arith.constant 0 : i32
    return %c0_i32, %arg1 : i32, i32
  }
  func.func @transform_3(%arg0: i32, %arg1: i32) -> (i32, i32) {
    %c0_i32 = arith.constant 0 : i32
    %c0_i32_0 = arith.constant 0 : i32
    return %arg0, %c0_i32 : i32, i32
  }
  func.func @transform_4(%arg0: i32, %arg1: i32) -> (i32, i32) {
    %c0_i32 = arith.constant 0 : i32
    %c0_i32_0 = arith.constant 0 : i32
    return %arg0, %c0_i32 : i32, i32
  }
}

</mosaic_0001>

<llo_original>
// kernel: tpu_custom_call.1
$region0: #{tpu_custom_call.1}
  #allocation0 [shape = 'u32[]', space=smem, size = 0x4, offset = 0x4, fixed_abs, tag = 'smem constant byte address 0x4 - core index']
  #allocation1 [shape = 'u32[144,128]{1,0:T(1,128)}', space=vmem, size = 0x12000, scoped, tag = 'internal scratch']
  #allocation2 [shape = 'f32[8,1]{1,0:T(8,128)}', space=vmem, size = 0x1000, scoped, tag = 'scratch operand']
  #allocation3 [shape = 'f32[8,1]{1,0:T(8,128)}', space=vmem, size = 0x1000, scoped, tag = 'scratch operand']
  %s0 = inlined_call_operand.vmem [shape: f32[16,128], index: 0, kind: input, shape index: {}]
  %s1 = inlined_call_operand.hbm [shape: f32[128,256], index: 1, kind: input, shape index: {}]
  %s2 = inlined_call_operand.vmem [shape: f32[1,256], index: 2, kind: input, shape index: {}]
  %s3 = inlined_call_operand.vmem [shape: f32[16,1], index: 3, kind: input, shape index: {}]
  %s4 = inlined_call_operand.vmem [shape: f32[16,1], index: 4, kind: output, shape index: {}]
  %s5 = sld [smem:[#allocation0]]
  $region61: #{tpu_custom_call.1} parent=0
    _
  %s7 = ssub.s32 1, %s5
  %s8 = scalar_select 0, %s7, %s5
  $region1: #{tpu_custom_call.1} parent=0
    #allocation4 [shape = 'u8[131072]{0}', space=vmem, size = 0x20000, scoped, tag = 'input window, operand 1, single buffered']
    #allocation5 [shape = 's32[2]{0}', space=sflag, size = 0x8, scoped, tag = 'scoped memory for tpu_custom_call.1']
    %9 = vsyncpa [#allocation5], 0
    loop: start=0, step=1, limit=4
    $region2: #{tpu_custom_call.1} parent=1 // loop_pre_header
      _
    $region3: #{tpu_custom_call.1} parent=1 // loop_header
      %s11 = sphi 0, %s15
      %p12 = scmp.ge.s32.totalorder %s11, 4
      %s18 = sphi 0, %s30
      %s19 = sphi 0, %s26
      %s20 = sphi 0, %s18
      %s21 = sphi 0, %s19
      %s22 = sphi 0, %s20
      %s23 = sphi 0, %s21
      %s33 = sphi 0, %s35
      %s36 = sphi 0, %s33
      %s37 = sphi 0, %s36
      %s53 = sphi 0, %s37
      %s59 = sphi 0, %s61
      %s62 = sphi 0, %s59
      %s63 = sphi 0, %s62
      %s79 = sphi 0, %s63
      %s85 = sphi 0, %s87
      %s88 = sphi 0, %s85
      %s89 = sphi 0, %s88
      %s105 = sphi 0, %s89
      %s111 = sphi 0, %s113
      %s114 = sphi 0, %s111
      %s115 = sphi 0, %s114
      %s131 = sphi 0, %s115
      %s137 = sphi 0, %s139
      %s140 = sphi 0, %s137
      %s141 = sphi 0, %s140
      %s157 = sphi 0, %s141
    $region4: #{tpu_custom_call.1} parent=1 // loop_header_branch
      %14 = sbr.rel (%p12) target = $region8
    $region5: #{tpu_custom_call.1} parent=1 // loop_body
      %s16 = ssub.s32 %s11, 1
      %s17 = ssub.s32 %s11, 2
      %s24 = sadd.s32 1, %s19
      %p25 = scmp.ge.s32.totalorder %s24, 1
      %s26 = scalar_select %p25, 0, %s24
      %s27 = sadd.s32 1, %s18
      %s28 = scalar_select %p25, %s27, %s18
      %p29 = scmp.ge.s32.totalorder %s28, 2
      %s30 = scalar_select %p29, 0, %s28
      %s31 = ssub.s32 %s18, %s30
      %p32 = scmp.eq.s32.totalorder %s31, 0
      %s34 = sadd.s32 %s33, 1
      %s35 = scalar_select %p32, %s33, %s34
      %p38 = pneg %p32
      %p39 = scmp.eq.s32.totalorder %s11, 1
      %p40 = por %p38, %p39
      %p41 = scmp.ne.s32.totalorder %s33, %s36
      %p42 = scmp.eq.s32.totalorder %s11, 0
      %p43 = por %p41, %p42
      %p44 = scmp.ne.s32.totalorder %s33, %s36
      %p45 = scmp.eq.s32.totalorder %s16, 1
      %p46 = por %p44, %p45
      %p47 = scmp.ne.s32.totalorder %s36, %s37
      %p48 = scmp.eq.s32.totalorder %s16, 0
      %p49 = por %p47, %p48
      %p50 = scmp.ne.s32.totalorder %s36, %s37
      %p51 = scmp.eq.s32.totalorder %s17, 1
      %p52 = por %p50, %p51
      %p54 = scmp.ne.s32.totalorder %s37, %s53
      %p55 = scmp.eq.s32.totalorder %s17, 0
      %p56 = por %p54, %p55
      %s57 = ssub.s32 %s19, %s26
      %p58 = scmp.eq.s32.totalorder %s57, 0
      %s60 = sadd.s32 %s59, 1
      %s61 = scalar_select %p58, %s59, %s60
      %p64 = pneg %p58
      %p65 = scmp.eq.s32.totalorder %s11, 1
      %p66 = por %p64, %p65
      %p67 = scmp.ne.s32.totalorder %s59, %s62
      %p68 = scmp.eq.s32.totalorder %s11, 0
      %p69 = por %p67, %p68
      %p70 = scmp.ne.s32.totalorder %s59, %s62
      %p71 = scmp.eq.s32.totalorder %s16, 1
      %p72 = por %p70, %p71
      %p73 = scmp.ne.s32.totalorder %s62, %s63
      %p74 = scmp.eq.s32.totalorder %s16, 0
      %p75 = por %p73, %p74
      %p76 = scmp.ne.s32.totalorder %s62, %s63
      %p77 = scmp.eq.s32.totalorder %s17, 1
      %p78 = por %p76, %p77
      %p80 = scmp.ne.s32.totalorder %s63, %s79
      %p81 = scmp.eq.s32.totalorder %s17, 0
      %p82 = por %p80, %p81
      %s83 = ssub.s32 %s19, %s26
      %p84 = scmp.eq.s32.totalorder %s83, 0
      %s86 = sadd.s32 %s85, 1
      %s87 = scalar_select %p84, %s85, %s86
      %p90 = pneg %p84
      %p91 = scmp.eq.s32.totalorder %s11, 1
      %p92 = por %p90, %p91
      %p93 = scmp.ne.s32.totalorder %s85, %s88
      %p94 = scmp.eq.s32.totalorder %s11, 0
      %p95 = por %p93, %p94
      %p96 = scmp.ne.s32.totalorder %s85, %s88
      %p97 = scmp.eq.s32.totalorder %s16, 1
      %p98 = por %p96, %p97
      %p99 = scmp.ne.s32.totalorder %s88, %s89
      %p100 = scmp.eq.s32.totalorder %s16, 0
      %p101 = por %p99, %p100
      %p102 = scmp.ne.s32.totalorder %s88, %s89
      %p103 = scmp.eq.s32.totalorder %s17, 1
      %p104 = por %p102, %p103
      %p106 = scmp.ne.s32.totalorder %s89, %s105
      %p107 = scmp.eq.s32.totalorder %s17, 0
      %p108 = por %p106, %p107
      %s109 = ssub.s32 %s18, %s30
      %p110 = scmp.eq.s32.totalorder %s109, 0
      %s112 = sadd.s32 %s111, 1
      %s113 = scalar_select %p110, %s111, %s112
      %p116 = pneg %p110
      %p117 = scmp.eq.s32.totalorder %s11, 1
      %p118 = por %p116, %p117
      %p119 = scmp.ne.s32.totalorder %s111, %s114
      %p120 = scmp.eq.s32.totalorder %s11, 0
      %p121 = por %p119, %p120
      %p122 = scmp.ne.s32.totalorder %s111, %s114
      %p123 = scmp.eq.s32.totalorder %s16, 1
      %p124 = por %p122, %p123
      %p125 = scmp.ne.s32.totalorder %s114, %s115
      %p126 = scmp.eq.s32.totalorder %s16, 0
      %p127 = por %p125, %p126
      %p128 = scmp.ne.s32.totalorder %s114, %s115
      %p129 = scmp.eq.s32.totalorder %s17, 1
      %p130 = por %p128, %p129
      %p132 = scmp.ne.s32.totalorder %s115, %s131
      %p133 = scmp.eq.s32.totalorder %s17, 0
      %p134 = por %p132, %p133
      %s135 = ssub.s32 %s18, %s30
      %p136 = scmp.eq.s32.totalorder %s135, 0
      %s138 = sadd.s32 %s137, 1
      %s139 = scalar_select %p136, %s137, %s138
      %p142 = pneg %p136
      %p143 = scmp.eq.s32.totalorder %s11, 1
      %p144 = por %p142, %p143
      %p145 = scmp.ne.s32.totalorder %s137, %s140
      %p146 = scmp.eq.s32.totalorder %s11, 0
      %p147 = por %p145, %p146
      %p148 = scmp.ne.s32.totalorder %s137, %s140
      %p149 = scmp.eq.s32.totalorder %s16, 1
      %p150 = por %p148, %p149
      %p151 = scmp.ne.s32.totalorder %s140, %s141
      %p152 = scmp.eq.s32.totalorder %s16, 0
      %p153 = por %p151, %p152
      %p154 = scmp.ne.s32.totalorder %s140, %s141
      %p155 = scmp.eq.s32.totalorder %s17, 1
      %p156 = por %p154, %p155
      %p158 = scmp.ne.s32.totalorder %s141, %s157
      %p159 = scmp.eq.s32.totalorder %s17, 0
      %p160 = por %p158, %p159
      %p161 = scmp.le.s32.totalorder 1, %s11
      %p162 = scmp.lt.s32.totalorder %s11, 3
      %p163 = pnand %p161, %p162
      %p164 = pneg %p163
      // Predicated region
      $region9: #{tpu_custom_call.1} parent=5 // pred_check
        _
      $region10: #{tpu_custom_call.1} parent=5 // pred_check_branch
        %166 = sbr.rel (%p163) target = $region12
      $region11: #{tpu_custom_call.1} parent=5 // pred_region
        %s167 = ssub.s32 %s11, 1
        // Predicated region
        $region13: #{tpu_custom_call.1} parent=11 // pred_check
          %p168 = pneg %p75
        $region14: #{tpu_custom_call.1} parent=11 // pred_check_branch
          %170 = sbr.rel (%p168) target = $region16
        $region15: #{tpu_custom_call.1} parent=11 // pred_region
          %s171 = smul.u32 2, %s21
          %s173 = ssub.s32 4096, 4096
          %174 = vsyncadd [#allocation5], %s173
          %s175 = smul.addr %s171, 128
          %s176 = scalar_lea.hbm %s1, %s175
          %s177 = sshll.u32 [#allocation4], 4
          %s178 = int_to_ptr.vmem [resolvable:$true] %s177
          %183 = dma.hbm_to_vmem [thread:$0]  %s176, 4096, %s178, [#allocation5], 256, 256, 16
        $region16: #{tpu_custom_call.1} parent=11 // pred_fallthru
          _
        // Predicated region
        $region17: #{tpu_custom_call.1} parent=11 // pred_check
          %p184 = pneg %p101
        $region18: #{tpu_custom_call.1} parent=11 // pred_check_branch
          %186 = sbr.rel (%p184) target = $region20
        $region19: #{tpu_custom_call.1} parent=11 // pred_region
          %s187 = smul.u32 2, %s21
          %p188 = scmp.lt.s32.totalorder %s187, 1
          %s189 = scalar_select %p188, %s187, 1
          %s190 = scalar_lea.vmem %s2, %s189
          %s191 = smul.u32 2, %s21
        $region20: #{tpu_custom_call.1} parent=11 // pred_fallthru
          _
      $region12: #{tpu_custom_call.1} parent=5 // pred_fallthru
        _
      %p192 = scmp.lt.s32.totalorder %s11, 2
      // Predicated region
      $region21: #{tpu_custom_call.1} parent=5 // pred_check
        %p193 = pneg %p192
      $region22: #{tpu_custom_call.1} parent=5 // pred_check_branch
        %195 = sbr.rel (%p193) target = $region24
      $region23: #{tpu_custom_call.1} parent=5 // pred_region
        // Predicated region
        $region25: #{tpu_custom_call.1} parent=23 // pred_check
          %p196 = pneg %p43
        $region26: #{tpu_custom_call.1} parent=23 // pred_check_branch
          %198 = sbr.rel (%p196) target = $region28
        $region27: #{tpu_custom_call.1} parent=23 // pred_region
          %p199 = scmp.lt.s32.totalorder %s18, 1
          %s200 = scalar_select %p199, %s18, 1
          %s201 = smul.addr %s200, 8
          %s202 = scalar_lea.vmem %s0, %s201
        $region28: #{tpu_custom_call.1} parent=23 // pred_fallthru
          _
        // Predicated region
        $region29: #{tpu_custom_call.1} parent=23 // pred_check
          %p203 = pneg %p121
        $region30: #{tpu_custom_call.1} parent=23 // pred_check_branch
          %205 = sbr.rel (%p203) target = $region32
        $region31: #{tpu_custom_call.1} parent=23 // pred_region
          %p206 = scmp.lt.s32.totalorder %s18, 1
          %s207 = scalar_select %p206, %s18, 1
          %s208 = smul.addr %s207, 8
          %s209 = scalar_lea.vmem %s3, %s208
        $region32: #{tpu_custom_call.1} parent=23 // pred_fallthru
          _
      $region24: #{tpu_custom_call.1} parent=5 // pred_fallthru
        _
      %p210 = scmp.le.s32.totalorder 1, %s11
      %p211 = scmp.lt.s32.totalorder %s11, 3
      %p212 = pnand %p210, %p211
      %p213 = pneg %p212
      // Predicated region
      $region33: #{tpu_custom_call.1} parent=5 // pred_check
        _
      $region34: #{tpu_custom_call.1} parent=5 // pred_check_branch
        %215 = sbr.rel (%p212) target = $region36
      $region35: #{tpu_custom_call.1} parent=5 // pred_region
        %s216 = ssub.s32 %s11, 1
        // Predicated region
        $region37: #{tpu_custom_call.1} parent=35 // pred_check
          %p217 = pneg %p75
        $region38: #{tpu_custom_call.1} parent=35 // pred_check_branch
          %219 = sbr.rel (%p217) target = $region40
        $region39: #{tpu_custom_call.1} parent=35 // pred_region
          %220 = dma.done [#allocation5], 4096
        $region40: #{tpu_custom_call.1} parent=35 // pred_fallthru
          _
        %p221 = scmp.lt.s32.totalorder %s20, 1
        %s222 = scalar_select %p221, %s20, 1
        %s223 = smul.addr %s222, 8
        %s224 = scalar_lea.vmem %s0, %s223
        %p225 = pneg %p49
        %p226 = pneg %p46
        %p227 = pneg %p75
        %p228 = pneg %p72
        %s229 = smul.u32 2, %s21
        %p230 = scmp.lt.s32.totalorder %s229, 1
        %s231 = scalar_select %p230, %s229, 1
        %s232 = scalar_lea.vmem %s2, %s231
        %p233 = pneg %p101
        %p234 = pneg %p98
        %p235 = scmp.lt.s32.totalorder %s20, 1
        %s236 = scalar_select %p235, %s20, 1
        %s237 = smul.addr %s236, 8
        %s238 = scalar_lea.vmem %s3, %s237
        %p239 = pneg %p127
        %p240 = pneg %p124
        %p241 = pneg %p153
        %p242 = pneg %p150
        %p243 = scmp.lt.s32.totalorder %s20, 1
        %s244 = scalar_select %p243, %s20, 1
        %s245 = smul.addr %s244, 8
        %s246 = scalar_lea.vmem %s4, %s245
        %p247 = scmp.lt.s32.totalorder %s20, 1
        %s248 = scalar_select %p247, %s20, 1
        %s249 = smul.addr %s248, 8
        %s250 = scalar_lea.vmem %s0, %s249
        %s251 = smul.u32 2, %s21
        %s252 = smul.u32 2, %s21
        %p253 = scmp.lt.s32.totalorder %s252, 1
        %s254 = scalar_select %p253, %s252, 1
        %s255 = scalar_lea.vmem %s2, %s254
        %s256 = smul.u32 2, %s21
        %p257 = scmp.lt.s32.totalorder %s20, 1
        %s258 = scalar_select %p257, %s20, 1
        %s259 = smul.addr %s258, 8
        %s260 = scalar_lea.vmem %s3, %s259
        %p261 = scmp.lt.s32.totalorder %s20, 1
        %s262 = scalar_select %p261, %s20, 1
        %s263 = smul.addr %s262, 8
        %s264 = scalar_lea.vmem %s4, %s263
        %p265 = scmp.eq.s32.totalorder %s21, 0
        // Predicated region
        $region41: #{tpu_custom_call.1} parent=35 // pred_check
          %p266 = pneg %p265
        $region42: #{tpu_custom_call.1} parent=35 // pred_check_branch
          %268 = sbr.rel (%p266) target = $region44
        $region43: #{tpu_custom_call.1} parent=35 // pred_region
          %vm269 = vcmask 7168
          %270 = vst.msk [vmem:[#allocation2] sm:$0xff] %vm269, -inf
          %271 = vst.msk [vmem:[#allocation3] sm:$0xff] %vm269, inf
        $region44: #{tpu_custom_call.1} parent=35 // pred_fallthru
          _
        %v272 = vld [vmem:[%s250] sm:$0xff]
        %v273 = vld [vmem:[#allocation4] sm:$0xff]
        %v274 = vld [vmem:[#allocation4 + $0x8] sm:$0xff]
        %v275 = vld [vmem:[#allocation4 + $0x10] sm:$0xff]
        %v276 = vld [vmem:[#allocation4 + $0x18] sm:$0xff]
        %v277 = vld [vmem:[#allocation4 + $0x20] sm:$0xff]
        %v278 = vld [vmem:[#allocation4 + $0x28] sm:$0xff]
        %v279 = vld [vmem:[#allocation4 + $0x30] sm:$0xff]
        %v280 = vld [vmem:[#allocation4 + $0x38] sm:$0xff]
        %v281 = vld [vmem:[#allocation4 + $0x40] sm:$0xff]
        %v282 = vld [vmem:[#allocation4 + $0x48] sm:$0xff]
        %v283 = vld [vmem:[#allocation4 + $0x50] sm:$0xff]
        %v284 = vld [vmem:[#allocation4 + $0x58] sm:$0xff]
        %v285 = vld [vmem:[#allocation4 + $0x60] sm:$0xff]
        %v286 = vld [vmem:[#allocation4 + $0x68] sm:$0xff]
        %v287 = vld [vmem:[#allocation4 + $0x70] sm:$0xff]
        %v288 = vld [vmem:[#allocation4 + $0x78] sm:$0xff]
        %v289 = vld [vmem:[#allocation4 + $0x80] sm:$0xff]
        %v290 = vld [vmem:[#allocation4 + $0x88] sm:$0xff]
        %v291 = vld [vmem:[#allocation4 + $0x90] sm:$0xff]
        %v292 = vld [vmem:[#allocation4 + $0x98] sm:$0xff]
        %v293 = vld [vmem:[#allocation4 + $0xa0] sm:$0xff]
        %v294 = vld [vmem:[#allocation4 + $0xa8] sm:$0xff]
        %v295 = vld [vmem:[#allocation4 + $0xb0] sm:$0xff]
        %v296 = vld [vmem:[#allocation4 + $0xb8] sm:$0xff]
        %v297 = vld [vmem:[#allocation4 + $0xc0] sm:$0xff]
        %v298 = vld [vmem:[#allocation4 + $0xc8] sm:$0xff]
        %v299 = vld [vmem:[#allocation4 + $0xd0] sm:$0xff]
        %v300 = vld [vmem:[#allocation4 + $0xd8] sm:$0xff]
        %v301 = vld [vmem:[#allocation4 + $0xe0] sm:$0xff]
        %v302 = vld [vmem:[#allocation4 + $0xe8] sm:$0xff]
        %v303 = vld [vmem:[#allocation4 + $0xf0] sm:$0xff]
        %v304 = vld [vmem:[#allocation4 + $0xf8] sm:$0xff]
        %v305 = vand.u32 %v274, 4294901760
        %306 = vmatprep.subr.mxu0 %v305
        %v307 = vand.u32 %v273, 4294901760
        %308 = vmatpush1.msra.mxu0 %v307
        %v309 = vand.u32 %v276, 4294901760
        %310 = vmatprep.subr.mxu0 %v309
        %v311 = vand.u32 %v275, 4294901760
        %312 = vmatpush1.msra.mxu0 %v311
        %v313 = vand.u32 %v278, 4294901760
        %314 = vmatprep.subr.mxu0 %v313
        %v315 = vand.u32 %v277, 4294901760
        %316 = vmatpush1.msra.mxu0 %v315
        %v317 = vand.u32 %v280, 4294901760
        %318 = vmatprep.subr.mxu0 %v317
        %v319 = vand.u32 %v279, 4294901760
        %320 = vmatpush1.msra.mxu0 %v319
        %v321 = vand.u32 %v282, 4294901760
        %322 = vmatprep.subr.mxu0 %v321
        %v323 = vand.u32 %v281, 4294901760
        %324 = vmatpush1.msra.mxu0 %v323
        %v325 = vand.u32 %v284, 4294901760
        %326 = vmatprep.subr.mxu0 %v325
        %v327 = vand.u32 %v283, 4294901760
        %328 = vmatpush1.msra.mxu0 %v327
        %v329 = vand.u32 %v286, 4294901760
        %330 = vmatprep.subr.mxu0 %v329
        %v331 = vand.u32 %v285, 4294901760
        %332 = vmatpush1.msra.mxu0 %v331
        %v333 = vand.u32 %v288, 4294901760
        %334 = vmatprep.subr.mxu0 %v333
        %v335 = vand.u32 %v287, 4294901760
        %336 = vmatpush1.msra.mxu0 %v335
        %v337 = vand.u32 %v290, 4294901760
        %338 = vmatprep.subr.mxu0 %v337
        %v339 = vand.u32 %v289, 4294901760
        %340 = vmatpush1.msra.mxu0 %v339
        %v341 = vand.u32 %v292, 4294901760
        %342 = vmatprep.subr.mxu0 %v341
        %v343 = vand.u32 %v291, 4294901760
        %344 = vmatpush1.msra.mxu0 %v343
        %v345 = vand.u32 %v294, 4294901760
        %346 = vmatprep.subr.mxu0 %v345
        %v347 = vand.u32 %v293, 4294901760
        %348 = vmatpush1.msra.mxu0 %v347
        %v349 = vand.u32 %v296, 4294901760
        %350 = vmatprep.subr.mxu0 %v349
        %v351 = vand.u32 %v295, 4294901760
        %352 = vmatpush1.msra.mxu0 %v351
        %v353 = vand.u32 %v298, 4294901760
        %354 = vmatprep.subr.mxu0 %v353
        %v355 = vand.u32 %v297, 4294901760
        %356 = vmatpush1.msra.mxu0 %v355
        %v357 = vand.u32 %v300, 4294901760
        %358 = vmatprep.subr.mxu0 %v357
        %v359 = vand.u32 %v299, 4294901760
        %360 = vmatpush1.msra.mxu0 %v359
        %v361 = vand.u32 %v302, 4294901760
        %362 = vmatprep.subr.mxu0 %v361
        %v363 = vand.u32 %v301, 4294901760
        %364 = vmatpush1.msra.mxu0 %v363
        %v365 = vand.u32 %v304, 4294901760
        %366 = vmatprep.subr.mxu0 %v365
        %v367 = vand.u32 %v303, 4294901760
        %368 = vmatpush1.msra.mxu0 %v367
        %369 = vmatprep.subr.mxu0 0.0
        %370 = vmatpush1.msra.mxu0 0.0
        %371 = vmatprep.subr.mxu0 0.0
        %372 = vmatpush1.msra.mxu0 0.0
        %373 = vmatprep.subr.mxu0 0.0
        %374 = vmatpush1.msra.mxu0 0.0
        %375 = vmatprep.subr.mxu0 0.0
        %376 = vmatpush1.msra.mxu0 0.0
        %377 = vmatprep.subr.mxu0 0.0
        %378 = vmatpush1.msra.mxu0 0.0
        %379 = vmatprep.subr.mxu0 0.0
        %380 = vmatpush1.msra.mxu0 0.0
        %381 = vmatprep.subr.mxu0 0.0
        %382 = vmatpush1.msra.mxu0 0.0
        %383 = vmatprep.subr.mxu0 0.0
        %384 = vmatpush1.msra.mxu0 0.0
        %385 = vmatprep.subr.mxu0 0.0
        %386 = vmatpush1.msra.mxu0 0.0
        %387 = vmatprep.subr.mxu0 0.0
        %388 = vmatpush1.msra.mxu0 0.0
        %389 = vmatprep.subr.mxu0 0.0
        %390 = vmatpush1.msra.mxu0 0.0
        %391 = vmatprep.subr.mxu0 0.0
        %392 = vmatpush1.msra.mxu0 0.0
        %393 = vmatprep.subr.mxu0 0.0
        %394 = vmatpush1.msra.mxu0 0.0
        %395 = vmatprep.subr.mxu0 0.0
        %396 = vmatpush1.msra.mxu0 0.0
        %397 = vmatprep.subr.mxu0 0.0
        %398 = vmatpush1.msra.mxu0 0.0
        %399 = vmatprep.subr.mxu0 0.0
        %400 = vmatpush1.msra.mxu0 0.0
        %401 = vmatprep.mubr.f32.mxu0 0.0
        %v402 = vand.u32 %v272, 4294901760
        %v403 = vsub.f32 %v272, %v402
        %v404 = vand.u32 %v403, 4294901760
        %v405 = vsub.f32 %v403, %v404
        %v406 = vand.u32 %v405, 4294901760
        %407 = vmatmul.mubr.f32.gmra.mrb[0].mxu0 %v406
        %v408 = vpop.f32.mrb[0].mxu0
        %v409 = vadd.f32 0.0, %v408
        %v410 = vpop.f32.mrb[0].mxu0
        %v411 = vadd.f32 0.0, %v410
        %412 = vdwg.mxu0
        %v413 = vand.u32 %v274, 4294901760
        %v414 = vsub.f32 %v274, %v413
        %v415 = vand.u32 %v414, 4294901760
        %v416 = vsub.f32 %v414, %v415
        %v417 = vand.u32 %v416, 4294901760
        %418 = vmatprep.subr.mxu0 %v417
        %v419 = vand.u32 %v273, 4294901760
        %v420 = vsub.f32 %v273, %v419
        %v421 = vand.u32 %v420, 4294901760
        %v422 = vsub.f32 %v420, %v421
        %v423 = vand.u32 %v422, 4294901760
        %424 = vmatpush1.msra.mxu0 %v423
        %v425 = vand.u32 %v276, 4294901760
        %v426 = vsub.f32 %v276, %v425
        %v427 = vand.u32 %v426, 4294901760
        %v428 = vsub.f32 %v426, %v427
        %v429 = vand.u32 %v428, 4294901760
        %430 = vmatprep.subr.mxu0 %v429
        %v431 = vand.u32 %v275, 4294901760
        %v432 = vsub.f32 %v275, %v431
        %v433 = vand.u32 %v432, 4294901760
        %v434 = vsub.f32 %v432, %v433
        %v435 = vand.u32 %v434, 4294901760
        %436 = vmatpush1.msra.mxu0 %v435
        %v437 = vand.u32 %v278, 4294901760
        %v438 = vsub.f32 %v278, %v437
        %v439 = vand.u32 %v438, 4294901760
        %v440 = vsub.f32 %v438, %v439
        %v441 = vand.u32 %v440, 4294901760
        %442 = vmatprep.subr.mxu0 %v441
        %v443 = vand.u32 %v277, 4294901760
        %v444 = vsub.f32 %v277, %v443
        %v445 = vand.u32 %v444, 4294901760
        %v446 = vsub.f32 %v444, %v445
        %v447 = vand.u32 %v446, 4294901760
        %448 = vmatpush1.msra.mxu0 %v447
        %v449 = vand.u32 %v280, 4294901760
        %v450 = vsub.f32 %v280, %v449
        %v451 = vand.u32 %v450, 4294901760
        %v452 = vsub.f32 %v450, %v451
        %v453 = vand.u32 %v452, 4294901760
        %454 = vmatprep.subr.mxu0 %v453
        %v455 = vand.u32 %v279, 4294901760
        %v456 = vsub.f32 %v279, %v455
        %v457 = vand.u32 %v456, 4294901760
        %v458 = vsub.f32 %v456, %v457
        %v459 = vand.u32 %v458, 4294901760
        %460 = vmatpush1.msra.mxu0 %v459
        %v461 = vand.u32 %v282, 4294901760
        %v462 = vsub.f32 %v282, %v461
        %v463 = vand.u32 %v462, 4294901760
        %v464 = vsub.f32 %v462, %v463
        %v465 = vand.u32 %v464, 4294901760
        %466 = vmatprep.subr.mxu0 %v465
        %v467 = vand.u32 %v281, 4294901760
        %v468 = vsub.f32 %v281, %v467
        %v469 = vand.u32 %v468, 4294901760
        %v470 = vsub.f32 %v468, %v469
        %v471 = vand.u32 %v470, 4294901760
        %472 = vmatpush1.msra.mxu0 %v471
        %v473 = vand.u32 %v284, 4294901760
        %v474 = vsub.f32 %v284, %v473
        %v475 = vand.u32 %v474, 4294901760
        %v476 = vsub.f32 %v474, %v475
        %v477 = vand.u32 %v476, 4294901760
        %478 = vmatprep.subr.mxu0 %v477
        %v479 = vand.u32 %v283, 4294901760
        %v480 = vsub.f32 %v283, %v479
        %v481 = vand.u32 %v480, 4294901760
        %v482 = vsub.f32 %v480, %v481
        %v483 = vand.u32 %v482, 4294901760
        %484 = vmatpush1.msra.mxu0 %v483
        %v485 = vand.u32 %v286, 4294901760
        %v486 = vsub.f32 %v286, %v485
        %v487 = vand.u32 %v486, 4294901760
        %v488 = vsub.f32 %v486, %v487
        %v489 = vand.u32 %v488, 4294901760
        %490 = vmatprep.subr.mxu0 %v489
        %v491 = vand.u32 %v285, 4294901760
        %v492 = vsub.f32 %v285, %v491
        %v493 = vand.u32 %v492, 4294901760
        %v494 = vsub.f32 %v492, %v493
        %v495 = vand.u32 %v494, 4294901760
        %496 = vmatpush1.msra.mxu0 %v495
        %v497 = vand.u32 %v288, 4294901760
        %v498 = vsub.f32 %v288, %v497
        %v499 = vand.u32 %v498, 4294901760
        %v500 = vsub.f32 %v498, %v499
        %v501 = vand.u32 %v500, 4294901760
        %502 = vmatprep.subr.mxu0 %v501
        %v503 = vand.u32 %v287, 4294901760
        %v504 = vsub.f32 %v287, %v503
        %v505 = vand.u32 %v504, 4294901760
        %v506 = vsub.f32 %v504, %v505
        %v507 = vand.u32 %v506, 4294901760
        %508 = vmatpush1.msra.mxu0 %v507
        %v509 = vand.u32 %v290, 4294901760
        %v510 = vsub.f32 %v290, %v509
        %v511 = vand.u32 %v510, 4294901760
        %v512 = vsub.f32 %v510, %v511
        %v513 = vand.u32 %v512, 4294901760
        %514 = vmatprep.subr.mxu0 %v513
        %v515 = vand.u32 %v289, 4294901760
        %v516 = vsub.f32 %v289, %v515
        %v517 = vand.u32 %v516, 4294901760
        %v518 = vsub.f32 %v516, %v517
        %v519 = vand.u32 %v518, 4294901760
        %520 = vmatpush1.msra.mxu0 %v519
        %v521 = vand.u32 %v292, 4294901760
        %v522 = vsub.f32 %v292, %v521
        %v523 = vand.u32 %v522, 4294901760
        %v524 = vsub.f32 %v522, %v523
        %v525 = vand.u32 %v524, 4294901760
        %526 = vmatprep.subr.mxu0 %v525
        %v527 = vand.u32 %v291, 4294901760
        %v528 = vsub.f32 %v291, %v527
        %v529 = vand.u32 %v528, 4294901760
        %v530 = vsub.f32 %v528, %v529
        %v531 = vand.u32 %v530, 4294901760
        %532 = vmatpush1.msra.mxu0 %v531
        %v533 = vand.u32 %v294, 4294901760
        %v534 = vsub.f32 %v294, %v533
        %v535 = vand.u32 %v534, 4294901760
        %v536 = vsub.f32 %v534, %v535
        %v537 = vand.u32 %v536, 4294901760
        %538 = vmatprep.subr.mxu0 %v537
        %v539 = vand.u32 %v293, 4294901760
        %v540 = vsub.f32 %v293, %v539
        %v541 = vand.u32 %v540, 4294901760
        %v542 = vsub.f32 %v540, %v541
        %v543 = vand.u32 %v542, 4294901760
        %544 = vmatpush1.msra.mxu0 %v543
        %v545 = vand.u32 %v296, 4294901760
        %v546 = vsub.f32 %v296, %v545
        %v547 = vand.u32 %v546, 4294901760
        %v548 = vsub.f32 %v546, %v547
        %v549 = vand.u32 %v548, 4294901760
        %550 = vmatprep.subr.mxu0 %v549
        %v551 = vand.u32 %v295, 4294901760
        %v552 = vsub.f32 %v295, %v551
        %v553 = vand.u32 %v552, 4294901760
        %v554 = vsub.f32 %v552, %v553
        %v555 = vand.u32 %v554, 4294901760
        %556 = vmatpush1.msra.mxu0 %v555
        %v557 = vand.u32 %v298, 4294901760
        %v558 = vsub.f32 %v298, %v557
        %v559 = vand.u32 %v558, 4294901760
        %v560 = vsub.f32 %v558, %v559
        %v561 = vand.u32 %v560, 4294901760
        %562 = vmatprep.subr.mxu0 %v561
        %v563 = vand.u32 %v297, 4294901760
        %v564 = vsub.f32 %v297, %v563
        %v565 = vand.u32 %v564, 4294901760
        %v566 = vsub.f32 %v564, %v565
        %v567 = vand.u32 %v566, 4294901760
        %568 = vmatpush1.msra.mxu0 %v567
        %v569 = vand.u32 %v300, 4294901760
        %v570 = vsub.f32 %v300, %v569
        %v571 = vand.u32 %v570, 4294901760
        %v572 = vsub.f32 %v570, %v571
        %v573 = vand.u32 %v572, 4294901760
        %574 = vmatprep.subr.mxu0 %v573
        %v575 = vand.u32 %v299, 4294901760
        %v576 = vsub.f32 %v299, %v575
        %v577 = vand.u32 %v576, 4294901760
        %v578 = vsub.f32 %v576, %v577
        %v579 = vand.u32 %v578, 4294901760
        %580 = vmatpush1.msra.mxu0 %v579
        %v581 = vand.u32 %v302, 4294901760
        %v582 = vsub.f32 %v302, %v581
        %v583 = vand.u32 %v582, 4294901760
        %v584 = vsub.f32 %v582, %v583
        %v585 = vand.u32 %v584, 4294901760
        %586 = vmatprep.subr.mxu0 %v585
        %v587 = vand.u32 %v301, 4294901760
        %v588 = vsub.f32 %v301, %v587
        %v589 = vand.u32 %v588, 4294901760
        %v590 = vsub.f32 %v588, %v589
        %v591 = vand.u32 %v590, 4294901760
        %592 = vmatpush1.msra.mxu0 %v591
        %v593 = vand.u32 %v304, 4294901760
        %v594 = vsub.f32 %v304, %v593
        %v595 = vand.u32 %v594, 4294901760
        %v596 = vsub.f32 %v594, %v595
        %v597 = vand.u32 %v596, 4294901760
        %598 = vmatprep.subr.mxu0 %v597
        %v599 = vand.u32 %v303, 4294901760
        %v600 = vsub.f32 %v303, %v599
        %v601 = vand.u32 %v600, 4294901760
        %v602 = vsub.f32 %v600, %v601
        %v603 = vand.u32 %v602, 4294901760
        %604 = vmatpush1.msra.mxu0 %v603
        %605 = vmatprep.subr.mxu0 0.0
        %606 = vmatpush1.msra.mxu0 0.0
        %607 = vmatprep.subr.mxu0 0.0
        %608 = vmatpush1.msra.mxu0 0.0
        %609 = vmatprep.subr.mxu0 0.0
        %610 = vmatpush1.msra.mxu0 0.0
        %611 = vmatprep.subr.mxu0 0.0
        %612 = vmatpush1.msra.mxu0 0.0
        %613 = vmatprep.subr.mxu0 0.0
        %614 = vmatpush1.msra.mxu0 0.0
        %615 = vmatprep.subr.mxu0 0.0
        %616 = vmatpush1.msra.mxu0 0.0
        %617 = vmatprep.subr.mxu0 0.0
        %618 = vmatpush1.msra.mxu0 0.0
        %619 = vmatprep.subr.mxu0 0.0
        %620 = vmatpush1.msra.mxu0 0.0
        %621 = vmatprep.subr.mxu0 0.0
        %622 = vmatpush1.msra.mxu0 0.0
        %623 = vmatprep.subr.mxu0 0.0
        %624 = vmatpush1.msra.mxu0 0.0
        %625 = vmatprep.subr.mxu0 0.0
        %626 = vmatpush1.msra.mxu0 0.0
        %627 = vmatprep.subr.mxu0 0.0
        %628 = vmatpush1.msra.mxu0 0.0
        %629 = vmatprep.subr.mxu0 0.0
        %630 = vmatpush1.msra.mxu0 0.0
        %631 = vmatprep.subr.mxu0 0.0
        %632 = vmatpush1.msra.mxu0 0.0
        %633 = vmatprep.subr.mxu0 0.0
        %634 = vmatpush1.msra.mxu0 0.0
        %635 = vmatprep.subr.mxu0 0.0
        %636 = vmatpush1.msra.mxu0 0.0
        %637 = vmatprep.mubr.f32.mxu0 0.0
        %v638 = vand.u32 %v272, 4294901760
        %639 = vmatmul.mubr.f32.gmra.mrb[0].mxu0 %v638
        %v640 = vpop.f32.mrb[0].mxu0
        %v641 = vadd.f32 %v409, %v640
        %v642 = vpop.f32.mrb[0].mxu0
        %v643 = vadd.f32 %v411, %v642
        %644 = vdwg.mxu0
        %v645 = vand.u32 %v274, 4294901760
        %v646 = vsub.f32 %v274, %v645
        %647 = vmatprep.subr.mxu0 %v646
        %v648 = vand.u32 %v273, 4294901760
        %v649 = vsub.f32 %v273, %v648
        %650 = vmatpush1.msra.mxu0 %v649
        %v651 = vand.u32 %v276, 4294901760
        %v652 = vsub.f32 %v276, %v651
        %653 = vmatprep.subr.mxu0 %v652
        %v654 = vand.u32 %v275, 4294901760
        %v655 = vsub.f32 %v275, %v654
        %656 = vmatpush1.msra.mxu0 %v655
        %v657 = vand.u32 %v278, 4294901760
        %v658 = vsub.f32 %v278, %v657
        %659 = vmatprep.subr.mxu0 %v658
        %v660 = vand.u32 %v277, 4294901760
        %v661 = vsub.f32 %v277, %v660
        %662 = vmatpush1.msra.mxu0 %v661
        %v663 = vand.u32 %v280, 4294901760
        %v664 = vsub.f32 %v280, %v663
        %665 = vmatprep.subr.mxu0 %v664
        %v666 = vand.u32 %v279, 4294901760
        %v667 = vsub.f32 %v279, %v666
        %668 = vmatpush1.msra.mxu0 %v667
        %v669 = vand.u32 %v282, 4294901760
        %v670 = vsub.f32 %v282, %v669
        %671 = vmatprep.subr.mxu0 %v670
        %v672 = vand.u32 %v281, 4294901760
        %v673 = vsub.f32 %v281, %v672
        %674 = vmatpush1.msra.mxu0 %v673
        %v675 = vand.u32 %v284, 4294901760
        %v676 = vsub.f32 %v284, %v675
        %677 = vmatprep.subr.mxu0 %v676
        %v678 = vand.u32 %v283, 4294901760
        %v679 = vsub.f32 %v283, %v678
        %680 = vmatpush1.msra.mxu0 %v679
        %v681 = vand.u32 %v286, 4294901760
        %v682 = vsub.f32 %v286, %v681
        %683 = vmatprep.subr.mxu0 %v682
        %v684 = vand.u32 %v285, 4294901760
        %v685 = vsub.f32 %v285, %v684
        %686 = vmatpush1.msra.mxu0 %v685
        %v687 = vand.u32 %v288, 4294901760
        %v688 = vsub.f32 %v288, %v687
        %689 = vmatprep.subr.mxu0 %v688
        %v690 = vand.u32 %v287, 4294901760
        %v691 = vsub.f32 %v287, %v690
        %692 = vmatpush1.msra.mxu0 %v691
        %v693 = vand.u32 %v290, 4294901760
        %v694 = vsub.f32 %v290, %v693
        %695 = vmatprep.subr.mxu0 %v694
        %v696 = vand.u32 %v289, 4294901760
        %v697 = vsub.f32 %v289, %v696
        %698 = vmatpush1.msra.mxu0 %v697
        %v699 = vand.u32 %v292, 4294901760
        %v700 = vsub.f32 %v292, %v699
        %701 = vmatprep.subr.mxu0 %v700
        %v702 = vand.u32 %v291, 4294901760
        %v703 = vsub.f32 %v291, %v702
        %704 = vmatpush1.msra.mxu0 %v703
        %v705 = vand.u32 %v294, 4294901760
        %v706 = vsub.f32 %v294, %v705
        %707 = vmatprep.subr.mxu0 %v706
        %v708 = vand.u32 %v293, 4294901760
        %v709 = vsub.f32 %v293, %v708
        %710 = vmatpush1.msra.mxu0 %v709
        %v711 = vand.u32 %v296, 4294901760
        %v712 = vsub.f32 %v296, %v711
        %713 = vmatprep.subr.mxu0 %v712
        %v714 = vand.u32 %v295, 4294901760
        %v715 = vsub.f32 %v295, %v714
        %716 = vmatpush1.msra.mxu0 %v715
        %v717 = vand.u32 %v298, 4294901760
        %v718 = vsub.f32 %v298, %v717
        %719 = vmatprep.subr.mxu0 %v718
        %v720 = vand.u32 %v297, 4294901760
        %v721 = vsub.f32 %v297, %v720
        %722 = vmatpush1.msra.mxu0 %v721
        %v723 = vand.u32 %v300, 4294901760
        %v724 = vsub.f32 %v300, %v723
        %725 = vmatprep.subr.mxu0 %v724
        %v726 = vand.u32 %v299, 4294901760
        %v727 = vsub.f32 %v299, %v726
        %728 = vmatpush1.msra.mxu0 %v727
        %v729 = vand.u32 %v302, 4294901760
        %v730 = vsub.f32 %v302, %v729
        %731 = vmatprep.subr.mxu0 %v730
        %v732 = vand.u32 %v301, 4294901760
        %v733 = vsub.f32 %v301, %v732
        %734 = vmatpush1.msra.mxu0 %v733
        %v735 = vand.u32 %v304, 4294901760
        %v736 = vsub.f32 %v304, %v735
        %737 = vmatprep.subr.mxu0 %v736
        %v738 = vand.u32 %v303, 4294901760
        %v739 = vsub.f32 %v303, %v738
        %740 = vmatpush1.msra.mxu0 %v739
        %741 = vmatprep.subr.mxu0 0.0
        %742 = vmatpush1.msra.mxu0 0.0
        %743 = vmatprep.subr.mxu0 0.0
        %744 = vmatpush1.msra.mxu0 0.0
        %745 = vmatprep.subr.mxu0 0.0
        %746 = vmatpush1.msra.mxu0 0.0
        %747 = vmatprep.subr.mxu0 0.0
        %748 = vmatpush1.msra.mxu0 0.0
        %749 = vmatprep.subr.mxu0 0.0
        %750 = vmatpush1.msra.mxu0 0.0
        %751 = vmatprep.subr.mxu0 0.0
        %752 = vmatpush1.msra.mxu0 0.0
        %753 = vmatprep.subr.mxu0 0.0
        %754 = vmatpush1.msra.mxu0 0.0
        %755 = vmatprep.subr.mxu0 0.0
        %756 = vmatpush1.msra.mxu0 0.0
        %757 = vmatprep.subr.mxu0 0.0
        %758 = vmatpush1.msra.mxu0 0.0
        %759 = vmatprep.subr.mxu0 0.0
        %760 = vmatpush1.msra.mxu0 0.0
        %761 = vmatprep.subr.mxu0 0.0
        %762 = vmatpush1.msra.mxu0 0.0
        %763 = vmatprep.subr.mxu0 0.0
        %764 = vmatpush1.msra.mxu0 0.0
        %765 = vmatprep.subr.mxu0 0.0
        %766 = vmatpush1.msra.mxu0 0.0
        %767 = vmatprep.subr.mxu0 0.0
        %768 = vmatpush1.msra.mxu0 0.0
        %769 = vmatprep.subr.mxu0 0.0
        %770 = vmatpush1.msra.mxu0 0.0
        %771 = vmatprep.subr.mxu0 0.0
        %772 = vmatpush1.msra.mxu0 0.0
        %773 = vmatprep.mubr.f32.mxu0 0.0
        %v774 = vand.u32 %v272, 4294901760
        %v775 = vsub.f32 %v272, %v774
        %776 = vmatmul.mubr.f32.gmra.mrb[0].mxu0 %v775
        %v777 = vpop.f32.mrb[0].mxu0
        %v778 = vadd.f32 %v641, %v777
        %v779 = vpop.f32.mrb[0].mxu0
        %v780 = vadd.f32 %v643, %v779
        %781 = vdwg.mxu0
        %v782 = vand.u32 %v274, 4294901760
        %783 = vmatprep.subr.mxu0 %v782
        %v784 = vand.u32 %v273, 4294901760
        %785 = vmatpush1.msra.mxu0 %v784
        %v786 = vand.u32 %v276, 4294901760
        %787 = vmatprep.subr.mxu0 %v786
        %v788 = vand.u32 %v275, 4294901760
        %789 = vmatpush1.msra.mxu0 %v788
        %v790 = vand.u32 %v278, 4294901760
        %791 = vmatprep.subr.mxu0 %v790
        %v792 = vand.u32 %v277, 4294901760
        %793 = vmatpush1.msra.mxu0 %v792
        %v794 = vand.u32 %v280, 4294901760
        %795 = vmatprep.subr.mxu0 %v794
        %v796 = vand.u32 %v279, 4294901760
        %797 = vmatpush1.msra.mxu0 %v796
        %v798 = vand.u32 %v282, 4294901760
        %799 = vmatprep.subr.mxu0 %v798
        %v800 = vand.u32 %v281, 4294901760
        %801 = vmatpush1.msra.mxu0 %v800
        %v802 = vand.u32 %v284, 4294901760
        %803 = vmatprep.subr.mxu0 %v802
        %v804 = vand.u32 %v283, 4294901760
        %805 = vmatpush1.msra.mxu0 %v804
        %v806 = vand.u32 %v286, 4294901760
        %807 = vmatprep.subr.mxu0 %v806
        %v808 = vand.u32 %v285, 4294901760
        %809 = vmatpush1.msra.mxu0 %v808
        %v810 = vand.u32 %v288, 4294901760
        %811 = vmatprep.subr.mxu0 %v810
        %v812 = vand.u32 %v287, 4294901760
        %813 = vmatpush1.msra.mxu0 %v812
        %v814 = vand.u32 %v290, 4294901760
        %815 = vmatprep.subr.mxu0 %v814
        %v816 = vand.u32 %v289, 4294901760
        %817 = vmatpush1.msra.mxu0 %v816
        %v818 = vand.u32 %v292, 4294901760
        %819 = vmatprep.subr.mxu0 %v818
        %v820 = vand.u32 %v291, 4294901760
        %821 = vmatpush1.msra.mxu0 %v820
        %v822 = vand.u32 %v294, 4294901760
        %823 = vmatprep.subr.mxu0 %v822
        %v824 = vand.u32 %v293, 4294901760
        %825 = vmatpush1.msra.mxu0 %v824
        %v826 = vand.u32 %v296, 4294901760
        %827 = vmatprep.subr.mxu0 %v826
        %v828 = vand.u32 %v295, 4294901760
        %829 = vmatpush1.msra.mxu0 %v828
        %v830 = vand.u32 %v298, 4294901760
        %831 = vmatprep.subr.mxu0 %v830
        %v832 = vand.u32 %v297, 4294901760
        %833 = vmatpush1.msra.mxu0 %v832
        %v834 = vand.u32 %v300, 4294901760
        %835 = vmatprep.subr.mxu0 %v834
        %v836 = vand.u32 %v299, 4294901760
        %837 = vmatpush1.msra.mxu0 %v836
        %v838 = vand.u32 %v302, 4294901760
        %839 = vmatprep.subr.mxu0 %v838
        %v840 = vand.u32 %v301, 4294901760
        %841 = vmatpush1.msra.mxu0 %v840
        %v842 = vand.u32 %v304, 4294901760
        %843 = vmatprep.subr.mxu0 %v842
        %v844 = vand.u32 %v303, 4294901760
        %845 = vmatpush1.msra.mxu0 %v844
        %846 = vmatprep.subr.mxu0 0.0
        %847 = vmatpush1.msra.mxu0 0.0
        %848 = vmatprep.subr.mxu0 0.0
        %849 = vmatpush1.msra.mxu0 0.0
        %850 = vmatprep.subr.mxu0 0.0
        %851 = vmatpush1.msra.mxu0 0.0
        %852 = vmatprep.subr.mxu0 0.0
        %853 = vmatpush1.msra.mxu0 0.0
        %854 = vmatprep.subr.mxu0 0.0
        %855 = vmatpush1.msra.mxu0 0.0
        %856 = vmatprep.subr.mxu0 0.0
        %857 = vmatpush1.msra.mxu0 0.0
        %858 = vmatprep.subr.mxu0 0.0
        %859 = vmatpush1.msra.mxu0 0.0
        %860 = vmatprep.subr.mxu0 0.0
        %861 = vmatpush1.msra.mxu0 0.0
        %862 = vmatprep.subr.mxu0 0.0
        %863 = vmatpush1.msra.mxu0 0.0
        %864 = vmatprep.subr.mxu0 0.0
        %865 = vmatpush1.msra.mxu0 0.0
        %866 = vmatprep.subr.mxu0 0.0
        %867 = vmatpush1.msra.mxu0 0.0
        %868 = vmatprep.subr.mxu0 0.0
        %869 = vmatpush1.msra.mxu0 0.0
        %870 = vmatprep.subr.mxu0 0.0
        %871 = vmatpush1.msra.mxu0 0.0
        %872 = vmatprep.subr.mxu0 0.0
        %873 = vmatpush1.msra.mxu0 0.0
        %874 = vmatprep.subr.mxu0 0.0
        %875 = vmatpush1.msra.mxu0 0.0
        %876 = vmatprep.subr.mxu0 0.0
        %877 = vmatpush1.msra.mxu0 0.0
        %878 = vmatprep.mubr.f32.mxu0 0.0
        %v879 = vand.u32 %v272, 4294901760
        %v880 = vsub.f32 %v272, %v879
        %v881 = vand.u32 %v880, 4294901760
        %882 = vmatmul.mubr.f32.gmra.mrb[0].mxu0 %v881
        %v883 = vpop.f32.mrb[0].mxu0
        %v884 = vadd.f32 %v778, %v883
        %v885 = vpop.f32.mrb[0].mxu0
        %v886 = vadd.f32 %v780, %v885
        %887 = vdwg.mxu0
        %v888 = vand.u32 %v274, 4294901760
        %v889 = vsub.f32 %v274, %v888
        %v890 = vand.u32 %v889, 4294901760
        %891 = vmatprep.subr.mxu0 %v890
        %v892 = vand.u32 %v273, 4294901760
        %v893 = vsub.f32 %v273, %v892
        %v894 = vand.u32 %v893, 4294901760
        %895 = vmatpush1.msra.mxu0 %v894
        %v896 = vand.u32 %v276, 4294901760
        %v897 = vsub.f32 %v276, %v896
        %v898 = vand.u32 %v897, 4294901760
        %899 = vmatprep.subr.mxu0 %v898
        %v900 = vand.u32 %v275, 4294901760
        %v901 = vsub.f32 %v275, %v900
        %v902 = vand.u32 %v901, 4294901760
        %903 = vmatpush1.msra.mxu0 %v902
        %v904 = vand.u32 %v278, 4294901760
        %v905 = vsub.f32 %v278, %v904
        %v906 = vand.u32 %v905, 4294901760
        %907 = vmatprep.subr.mxu0 %v906
        %v908 = vand.u32 %v277, 4294901760
        %v909 = vsub.f32 %v277, %v908
        %v910 = vand.u32 %v909, 4294901760
        %911 = vmatpush1.msra.mxu0 %v910
        %v912 = vand.u32 %v280, 4294901760
        %v913 = vsub.f32 %v280, %v912
        %v914 = vand.u32 %v913, 4294901760
        %915 = vmatprep.subr.mxu0 %v914
        %v916 = vand.u32 %v279, 4294901760
        %v917 = vsub.f32 %v279, %v916
        %v918 = vand.u32 %v917, 4294901760
        %919 = vmatpush1.msra.mxu0 %v918
        %v920 = vand.u32 %v282, 4294901760
        %v921 = vsub.f32 %v282, %v920
        %v922 = vand.u32 %v921, 4294901760
        %923 = vmatprep.subr.mxu0 %v922
        %v924 = vand.u32 %v281, 4294901760
        %v925 = vsub.f32 %v281, %v924
        %v926 = vand.u32 %v925, 4294901760
        %927 = vmatpush1.msra.mxu0 %v926
        %v928 = vand.u32 %v284, 4294901760
        %v929 = vsub.f32 %v284, %v928
        %v930 = vand.u32 %v929, 4294901760
        %931 = vmatprep.subr.mxu0 %v930
        %v932 = vand.u32 %v283, 4294901760
        %v933 = vsub.f32 %v283, %v932
        %v934 = vand.u32 %v933, 4294901760
        %935 = vmatpush1.msra.mxu0 %v934
        %v936 = vand.u32 %v286, 4294901760
        %v937 = vsub.f32 %v286, %v936
        %v938 = vand.u32 %v937, 4294901760
        %939 = vmatprep.subr.mxu0 %v938
        %v940 = vand.u32 %v285, 4294901760
        %v941 = vsub.f32 %v285, %v940
        %v942 = vand.u32 %v941, 4294901760
        %943 = vmatpush1.msra.mxu0 %v942
        %v944 = vand.u32 %v288, 4294901760
        %v945 = vsub.f32 %v288, %v944
        %v946 = vand.u32 %v945, 4294901760
        %947 = vmatprep.subr.mxu0 %v946
        %v948 = vand.u32 %v287, 4294901760
        %v949 = vsub.f32 %v287, %v948
        %v950 = vand.u32 %v949, 4294901760
        %951 = vmatpush1.msra.mxu0 %v950
        %v952 = vand.u32 %v290, 4294901760
        %v953 = vsub.f32 %v290, %v952
        %v954 = vand.u32 %v953, 4294901760
        %955 = vmatprep.subr.mxu0 %v954
        %v956 = vand.u32 %v289, 4294901760
        %v957 = vsub.f32 %v289, %v956
        %v958 = vand.u32 %v957, 4294901760
        %959 = vmatpush1.msra.mxu0 %v958
        %v960 = vand.u32 %v292, 4294901760
        %v961 = vsub.f32 %v292, %v960
        %v962 = vand.u32 %v961, 4294901760
        %963 = vmatprep.subr.mxu0 %v962
        %v964 = vand.u32 %v291, 4294901760
        %v965 = vsub.f32 %v291, %v964
        %v966 = vand.u32 %v965, 4294901760
        %967 = vmatpush1.msra.mxu0 %v966
        %v968 = vand.u32 %v294, 4294901760
        %v969 = vsub.f32 %v294, %v968
        %v970 = vand.u32 %v969, 4294901760
        %971 = vmatprep.subr.mxu0 %v970
        %v972 = vand.u32 %v293, 4294901760
        %v973 = vsub.f32 %v293, %v972
        %v974 = vand.u32 %v973, 4294901760
        %975 = vmatpush1.msra.mxu0 %v974
        %v976 = vand.u32 %v296, 4294901760
        %v977 = vsub.f32 %v296, %v976
        %v978 = vand.u32 %v977, 4294901760
        %979 = vmatprep.subr.mxu0 %v978
        %v980 = vand.u32 %v295, 4294901760
        %v981 = vsub.f32 %v295, %v980
        %v982 = vand.u32 %v981, 4294901760
        %983 = vmatpush1.msra.mxu0 %v982
        %v984 = vand.u32 %v298, 4294901760
        %v985 = vsub.f32 %v298, %v984
        %v986 = vand.u32 %v985, 4294901760
        %987 = vmatprep.subr.mxu0 %v986
        %v988 = vand.u32 %v297, 4294901760
        %v989 = vsub.f32 %v297, %v988
        %v990 = vand.u32 %v989, 4294901760
        %991 = vmatpush1.msra.mxu0 %v990
        %v992 = vand.u32 %v300, 4294901760
        %v993 = vsub.f32 %v300, %v992
        %v994 = vand.u32 %v993, 4294901760
        %995 = vmatprep.subr.mxu0 %v994
        %v996 = vand.u32 %v299, 4294901760
        %v997 = vsub.f32 %v299, %v996
        %v998 = vand.u32 %v997, 4294901760
        %999 = vmatpush1.msra.mxu0 %v998
        %v1000 = vand.u32 %v302, 4294901760
        %v1001 = vsub.f32 %v302, %v1000
        %v1002 = vand.u32 %v1001, 4294901760
        %1003 = vmatprep.subr.mxu0 %v1002
        %v1004 = vand.u32 %v301, 4294901760
        %v1005 = vsub.f32 %v301, %v1004
        %v1006 = vand.u32 %v1005, 4294901760
        %1007 = vmatpush1.msra.mxu0 %v1006
        %v1008 = vand.u32 %v304, 4294901760
        %v1009 = vsub.f32 %v304, %v1008
        %v1010 = vand.u32 %v1009, 4294901760
        %1011 = vmatprep.subr.mxu0 %v1010
        %v1012 = vand.u32 %v303, 4294901760
        %v1013 = vsub.f32 %v303, %v1012
        %v1014 = vand.u32 %v1013, 4294901760
        %1015 = vmatpush1.msra.mxu0 %v1014
        %1016 = vmatprep.subr.mxu0 0.0
        %1017 = vmatpush1.msra.mxu0 0.0
        %1018 = vmatprep.subr.mxu0 0.0
        %1019 = vmatpush1.msra.mxu0 0.0
        %1020 = vmatprep.subr.mxu0 0.0
        %1021 = vmatpush1.msra.mxu0 0.0
        %1022 = vmatprep.subr.mxu0 0.0
        %1023 = vmatpush1.msra.mxu0 0.0
        %1024 = vmatprep.subr.mxu0 0.0
        %1025 = vmatpush1.msra.mxu0 0.0
        %1026 = vmatprep.subr.mxu0 0.0
        %1027 = vmatpush1.msra.mxu0 0.0
        %1028 = vmatprep.subr.mxu0 0.0
        %1029 = vmatpush1.msra.mxu0 0.0
        %1030 = vmatprep.subr.mxu0 0.0
        %1031 = vmatpush1.msra.mxu0 0.0
        %1032 = vmatprep.subr.mxu0 0.0
        %1033 = vmatpush1.msra.mxu0 0.0
        %1034 = vmatprep.subr.mxu0 0.0
        %1035 = vmatpush1.msra.mxu0 0.0
        %1036 = vmatprep.subr.mxu0 0.0
        %1037 = vmatpush1.msra.mxu0 0.0
        %1038 = vmatprep.subr.mxu0 0.0
        %1039 = vmatpush1.msra.mxu0 0.0
        %1040 = vmatprep.subr.mxu0 0.0
        %1041 = vmatpush1.msra.mxu0 0.0
        %1042 = vmatprep.subr.mxu0 0.0
        %1043 = vmatpush1.msra.mxu0 0.0
        %1044 = vmatprep.subr.mxu0 0.0
        %1045 = vmatpush1.msra.mxu0 0.0
        %1046 = vmatprep.subr.mxu0 0.0
        %1047 = vmatpush1.msra.mxu0 0.0
        %1048 = vmatprep.mubr.f32.mxu0 0.0
        %v1049 = vand.u32 %v272, 4294901760
        %1050 = vmatmul.mubr.f32.gmra.mrb[0].mxu0 %v1049
        %v1051 = vpop.f32.mrb[0].mxu0
        %v1052 = vadd.f32 %v884, %v1051
        %v1053 = vpop.f32.mrb[0].mxu0
        %v1054 = vadd.f32 %v886, %v1053
        %1055 = vdwg.mxu0
        %v1056 = vand.u32 %v274, 4294901760
        %1057 = vmatprep.subr.mxu0 %v1056
        %v1058 = vand.u32 %v273, 4294901760
        %1059 = vmatpush1.msra.mxu0 %v1058
        %v1060 = vand.u32 %v276, 4294901760
        %1061 = vmatprep.subr.mxu0 %v1060
        %v1062 = vand.u32 %v275, 4294901760
        %1063 = vmatpush1.msra.mxu0 %v1062
        %v1064 = vand.u32 %v278, 4294901760
        %1065 = vmatprep.subr.mxu0 %v1064
        %v1066 = vand.u32 %v277, 4294901760
        %1067 = vmatpush1.msra.mxu0 %v1066
        %v1068 = vand.u32 %v280, 4294901760
        %1069 = vmatprep.subr.mxu0 %v1068
        %v1070 = vand.u32 %v279, 4294901760
        %1071 = vmatpush1.msra.mxu0 %v1070
        %v1072 = vand.u32 %v282, 4294901760
        %1073 = vmatprep.subr.mxu0 %v1072
        %v1074 = vand.u32 %v281, 4294901760
        %1075 = vmatpush1.msra.mxu0 %v1074
        %v1076 = vand.u32 %v284, 4294901760
        %1077 = vmatprep.subr.mxu0 %v1076
        %v1078 = vand.u32 %v283, 4294901760
        %1079 = vmatpush1.msra.mxu0 %v1078
        %v1080 = vand.u32 %v286, 4294901760
        %1081 = vmatprep.subr.mxu0 %v1080
        %v1082 = vand.u32 %v285, 4294901760
        %1083 = vmatpush1.msra.mxu0 %v1082
        %v1084 = vand.u32 %v288, 4294901760
        %1085 = vmatprep.subr.mxu0 %v1084
        %v1086 = vand.u32 %v287, 4294901760
        %1087 = vmatpush1.msra.mxu0 %v1086
        %v1088 = vand.u32 %v290, 4294901760
        %1089 = vmatprep.subr.mxu0 %v1088
        %v1090 = vand.u32 %v289, 4294901760
        %1091 = vmatpush1.msra.mxu0 %v1090
        %v1092 = vand.u32 %v292, 4294901760
        %1093 = vmatprep.subr.mxu0 %v1092
        %v1094 = vand.u32 %v291, 4294901760
        %1095 = vmatpush1.msra.mxu0 %v1094
        %v1096 = vand.u32 %v294, 4294901760
        %1097 = vmatprep.subr.mxu0 %v1096
        %v1098 = vand.u32 %v293, 4294901760
        %1099 = vmatpush1.msra.mxu0 %v1098
        %v1100 = vand.u32 %v296, 4294901760
        %1101 = vmatprep.subr.mxu0 %v1100
        %v1102 = vand.u32 %v295, 4294901760
        %1103 = vmatpush1.msra.mxu0 %v1102
        %v1104 = vand.u32 %v298, 4294901760
        %1105 = vmatprep.subr.mxu0 %v1104
        %v1106 = vand.u32 %v297, 4294901760
        %1107 = vmatpush1.msra.mxu0 %v1106
        %v1108 = vand.u32 %v300, 4294901760
        %1109 = vmatprep.subr.mxu0 %v1108
        %v1110 = vand.u32 %v299, 4294901760
        %1111 = vmatpush1.msra.mxu0 %v1110
        %v1112 = vand.u32 %v302, 4294901760
        %1113 = vmatprep.subr.mxu0 %v1112
        %v1114 = vand.u32 %v301, 4294901760
        %1115 = vmatpush1.msra.mxu0 %v1114
        %v1116 = vand.u32 %v304, 4294901760
        %1117 = vmatprep.subr.mxu0 %v1116
        %v1118 = vand.u32 %v303, 4294901760
        %1119 = vmatpush1.msra.mxu0 %v1118
        %1120 = vmatprep.subr.mxu0 0.0
        %1121 = vmatpush1.msra.mxu0 0.0
        %1122 = vmatprep.subr.mxu0 0.0
        %1123 = vmatpush1.msra.mxu0 0.0
        %1124 = vmatprep.subr.mxu0 0.0
        %1125 = vmatpush1.msra.mxu0 0.0
        %1126 = vmatprep.subr.mxu0 0.0
        %1127 = vmatpush1.msra.mxu0 0.0
        %1128 = vmatprep.subr.mxu0 0.0
        %1129 = vmatpush1.msra.mxu0 0.0
        %1130 = vmatprep.subr.mxu0 0.0
        %1131 = vmatpush1.msra.mxu0 0.0
        %1132 = vmatprep.subr.mxu0 0.0
        %1133 = vmatpush1.msra.mxu0 0.0
        %1134 = vmatprep.subr.mxu0 0.0
        %1135 = vmatpush1.msra.mxu0 0.0
        %1136 = vmatprep.subr.mxu0 0.0
        %1137 = vmatpush1.msra.mxu0 0.0
        %1138 = vmatprep.subr.mxu0 0.0
        %1139 = vmatpush1.msra.mxu0 0.0
        %1140 = vmatprep.subr.mxu0 0.0
        %1141 = vmatpush1.msra.mxu0 0.0
        %1142 = vmatprep.subr.mxu0 0.0
        %1143 = vmatpush1.msra.mxu0 0.0
        %1144 = vmatprep.subr.mxu0 0.0
        %1145 = vmatpush1.msra.mxu0 0.0
        %1146 = vmatprep.subr.mxu0 0.0
        %1147 = vmatpush1.msra.mxu0 0.0
        %1148 = vmatprep.subr.mxu0 0.0
        %1149 = vmatpush1.msra.mxu0 0.0
        %1150 = vmatprep.subr.mxu0 0.0
        %1151 = vmatpush1.msra.mxu0 0.0
        %1152 = vmatprep.mubr.f32.mxu0 0.0
        %v1153 = vand.u32 %v272, 4294901760
        %1154 = vmatmul.mubr.f32.gmra.mrb[0].mxu0 %v1153
        %v1155 = vpop.f32.mrb[0].mxu0
        %v1156 = vadd.f32 %v1052, %v1155
        %v1157 = vpop.f32.mrb[0].mxu0
        %v1158 = vadd.f32 %v1054, %v1157
        %1159 = vdwg.mxu0
        %v1160 = vld [vmem:[%s255] sm:$0x3]
        %v1162 = vlaneseq
        %v1163 = vshrl.u32 %v1162, 7
        %v1164 = vsub.s32 0, %v1163
        %v1165 = vrot.slane %v1160, %v1164
        %v1166 = vlaneseq
        %v1167 = vshrl.u32 %v1166, 7
        %v1168 = vsub.s32 1, %v1167
        %v1169 = vrot.slane %v1160, %v1168
        %v1172 = vadd.f32 %v1165, %v1156
        %v1173 = vadd.f32 %v1169, %v1158
        %v1174 = vld [vmem:[#allocation2] sm:$0xff]
        %1175 = vmax.xlane.f32.xlu0 %v1172
        %v1176 = vpop.xlane.xlu0 %1175
        %v1177 = vmax.f32 %v1174, %v1176
        %vm1178 = vcmask 7168
        %1179 = vst.msk [vmem:[#allocation2] sm:$0xff] %vm1178, %v1177
        %v1180 = vld [vmem:[#allocation3] sm:$0xff]
        %1181 = vmin.xlane.f32.xlu0 %v1173
        %v1182 = vpop.xlane.xlu0 %1181
        %v1183 = vmin.f32 %v1180, %v1182
        %1184 = vst.msk [vmem:[#allocation3] sm:$0xff] %vm1178, %v1183
        // Predicated region
        $region45: #{tpu_custom_call.1} parent=35 // pred_check
          %p1185 = pneg %p265
        $region46: #{tpu_custom_call.1} parent=35 // pred_check_branch
          %1187 = sbr.rel (%p1185) target = $region48
        $region47: #{tpu_custom_call.1} parent=35 // pred_region
          %v1188 = vld [vmem:[%s260] sm:$0xff]
          %v1189 = vld [vmem:[#allocation2] sm:$0xff]
          %v1190 = vadd.f32 %v1188, %v1189
          %v1191 = vmax.f32 %v1190, 0.0
          %v1192 = vrsqrt.pop %v1191
          %v1193 = vmul.f32 %v1191, %v1192
          %vm1194 = vcmp.eq.f32.partialorder %v1191, inf
          %v1195 = vsel %vm1194, %v1191, %v1193
          %vm1196 = vcmp.eq.f32.partialorder %v1191, 0.0
          %v1197 = vand.u32 %v1191, 2147483648
          %v1198 = vsel %vm1196, %v1197, %v1195
          %v1199 = vld [vmem:[#allocation3] sm:$0xff]
          %v1200 = vadd.f32 %v1188, %v1199
          %v1201 = vmax.f32 %v1200, 0.0
          %v1202 = vrsqrt.pop %v1201
          %v1203 = vmul.f32 %v1201, %v1202
          %vm1204 = vcmp.eq.f32.partialorder %v1201, inf
          %v1205 = vsel %vm1204, %v1201, %v1203
          %vm1206 = vcmp.eq.f32.partialorder %v1201, 0.0
          %v1207 = vand.u32 %v1201, 2147483648
          %v1208 = vsel %vm1206, %v1207, %v1205
          %v1209 = vsub.f32 %v1198, %v1208
          %v1210 = vadd.f32 %v1209, 1.0
          %v1211 = vmax.f32 %v1210, 0.0
          %1212 = vst.msk [vmem:[%s264] sm:$0xff] %vm1178, %v1211
        $region48: #{tpu_custom_call.1} parent=35 // pred_fallthru
          _
        %p1213 = scmp.lt.s32.totalorder %s20, 1
        %s1214 = scalar_select %p1213, %s20, 1
        %s1215 = smul.addr %s1214, 8
        %s1216 = scalar_lea.vmem %s4, %s1215
        // Predicated region
        $region49: #{tpu_custom_call.1} parent=35 // pred_check
          %p1217 = pneg %p150
        $region50: #{tpu_custom_call.1} parent=35 // pred_check_branch
          %1219 = sbr.rel (%p1217) target = $region52
        $region51: #{tpu_custom_call.1} parent=35 // pred_region
          _
        $region52: #{tpu_custom_call.1} parent=35 // pred_fallthru
          _
      $region36: #{tpu_custom_call.1} parent=5 // pred_fallthru
        _
      %p1220 = scmp.le.s32.totalorder 2, %s11
      // Predicated region
      $region53: #{tpu_custom_call.1} parent=5 // pred_check
        %p1221 = pneg %p1220
      $region54: #{tpu_custom_call.1} parent=5 // pred_check_branch
        %1223 = sbr.rel (%p1221) target = $region56
      $region55: #{tpu_custom_call.1} parent=5 // pred_region
        %s1224 = ssub.s32 %s11, 2
        // Predicated region
        $region57: #{tpu_custom_call.1} parent=55 // pred_check
          %p1225 = pneg %p156
        $region58: #{tpu_custom_call.1} parent=55 // pred_check_branch
          %1227 = sbr.rel (%p1225) target = $region60
        $region59: #{tpu_custom_call.1} parent=55 // pred_region
          %p1228 = scmp.lt.s32.totalorder %s22, 1
          %s1229 = scalar_select %p1228, %s22, 1
          %s1230 = smul.addr %s1229, 8
          %s1231 = scalar_lea.vmem %s4, %s1230
        $region60: #{tpu_custom_call.1} parent=55 // pred_fallthru
          _
      $region56: #{tpu_custom_call.1} parent=5 // pred_fallthru
        _
    $region6: #{tpu_custom_call.1} parent=1 // loop_footer
      %s15 = sadd.s32 1, %s11
    $region7: #{tpu_custom_call.1} parent=1 // loop_footer_branch
      %10 = sbr.rel target = $region3
    $region8: #{tpu_custom_call.1} parent=1 // loop_exit
      _
    %1232 = vsyncpa [#allocation5], 1
    %s1233 = scalar_lea.sflag [#allocation5], 1
    %1234 = vsyncpa %s1233, 1

</llo_original>
